<compile_context>
chip_gen: v5e
topology: v5e:2x2
jax: 0.10.0
libtpu: 0.0.40
codegen_flags: <defaults>
</compile_context>

<pallas_src>
import jax
import jax.numpy as jnp
from jax.experimental import pallas as pl
from jax.experimental.pallas import tpu as pltpu

_LANES = 128


def _mish_kernel(x_ref, o_ref):
    x = x_ref[...].astype(jnp.float32)
    # tanh(softplus(x)) with one exp + one reciprocal:
    #   u = e^x ;  tanh(softplus(x)) = u(u+2) / (u^2 + 2u + 2)
    # rewritten with t = exp(-|x|) (t <= 1, never overflows):
    #   x >= 0 : (1 + 2t)      / (1 + 2t + 2t^2)
    #   x <  0 : (2t + t^2)    / (2 + 2t + t^2)
    t = jnp.exp(-jnp.abs(x))          # single EUP transcendental
    pos = x >= 0.0
    two_t = 2.0 * t
    tt = t * t
    num = jnp.where(pos, 1.0 + two_t, two_t + tt)
    den = jnp.where(pos, 1.0 + two_t + 2.0 * tt, 2.0 + two_t + tt)
    tanh_sp = num * pl.reciprocal(den, approx=False)  # exact: keeps 1e-5 tol
    o_ref[...] = (x * tanh_sp).astype(o_ref.dtype)


def _row_quantum(dtype) -> int:
    # sublane packing quantum: 8 rows for 32-bit, 16 for 16-bit, 32 for 8-bit
    itemsize = jnp.dtype(dtype).itemsize
    return 8 * max(1, 4 // itemsize)


def mish(x, *, row_tile=2048):
    """Mish on an arbitrary-shaped array (PyTorch NCHW input expected)."""
    orig_shape = x.shape
    dtype = x.dtype
    n = x.size

    sub = _row_quantum(dtype)
    align = sub * _LANES

    flat = x.reshape(-1)
    pad = (-n) % align
    if pad:
        # Ragged path only; aligned NCHW activations skip this extra HBM pass.
        flat = jnp.concatenate([flat, jnp.zeros((pad,), dtype=dtype)])
    rows = flat.size // _LANES
    slab = flat.reshape(rows, _LANES)

    # Large, lane-dense blocks; cap so grid >= 2 (megacore sharding on v7x).
    tr = min(row_tile, rows)
    if rows > sub:
        half = ((rows + 1) // 2 + sub - 1) // sub * sub
        tr = min(tr, half)
    tr = max(sub, tr // sub * sub)
    grid = (pl.cdiv(rows, tr),)  # partial final block handled/masked by Pallas

    itemsize = jnp.dtype(dtype).itemsize
    cost = pl.CostEstimate(
        flops=10 * n,
        transcendentals=2 * n,
        bytes_accessed=2 * n * itemsize,
    )

    out = pl.pallas_call(
        _mish_kernel,
        out_shape=jax.ShapeDtypeStruct((rows, _LANES), dtype),
        grid_spec=pltpu.PrefetchScalarGridSpec(
            num_scalar_prefetch=0,
            grid=grid,
            in_specs=[pl.BlockSpec((tr, _LANES), lambda i: (i, 0))],
            out_specs=pl.BlockSpec((tr, _LANES), lambda i: (i, 0)),
        ),
        compiler_params=pltpu.CompilerParams(
            dimension_semantics=("parallel",),
        ),
        cost_estimate=cost,
    )(slab)

    if pad:
        return out.reshape(-1)[:n].reshape(orig_shape)
    return out.reshape(orig_shape)


def mish_ref(x):
    xf = x.astype(jnp.float32)
    return (xf * jnp.tanh(jax.nn.softplus(xf))).astype(x.dtype)


if __name__ == "__main__":
    key = jax.random.PRNGKey(0)

    # Primary check: small NCHW activation (aligned copy-free path, grid = 2).
    x = jax.random.normal(key, (2, 4, 16, 16), dtype=jnp.float32)
    y = jax.block_until_ready(mish(x))
    y_ref = mish_ref(x)
    assert y.shape == x.shape and y.dtype == x.dtype
    assert jnp.allclose(y, y_ref, atol=1e-5, rtol=1e-5), "mismatch vs reference"

    # Partial-final-block path (tile does not divide rows) + wide value range.
    x2 = 8.0 * jax.random.normal(jax.random.PRNGKey(0), (1, 64, 20, 20),
                                 dtype=jnp.float32)
    y2 = jax.block_until_ready(mish(x2))
    assert jnp.allclose(y2, mish_ref(x2), atol=1e-5, rtol=1e-5), "mismatch (partial block)"

    # Ragged path (needs padding + trailing slice).
    x3 = jax.random.normal(jax.random.PRNGKey(0), (2, 3, 5, 7), dtype=jnp.float32)
    y3 = jax.block_until_ready(mish(x3))
    assert jnp.allclose(y3, mish_ref(x3), atol=1e-5, rtol=1e-5), "mismatch (ragged)"

    print("KERNEL_OK")
</pallas_src>

<mosaic_0001>
module attributes {stable_mosaic.version = 11 : i64} {
  func.func @_mish_kernel(%arg0: i32, %arg1: memref<8x128xf32, #tpu.memory_space<vmem>>, %arg2: memref<8x128xf32, #tpu.memory_space<vmem>>) attributes {dimension_semantics = [#tpu.dimension_semantics<parallel>], iteration_bounds = array<i64: 2>, scalar_prefetch = 0 : i64, scratch_operands = 0 : i64, tpu.core_type = #tpu.core_type<tc>, window_params = [{transform_indices = @transform_0, window_bounds = array<i64: 8, 128>}, {transform_indices = @transform_1, window_bounds = array<i64: 8, 128>}]} {
    %c0 = arith.constant 0 : index
    %c0_0 = arith.constant 0 : index
    %0 = vector.load %arg1[%c0, %c0_0] : memref<8x128xf32, #tpu.memory_space<vmem>>, vector<8x128xf32>
    %1 = math.absf %0 : vector<8x128xf32>
    %cst = arith.constant 0.000000e+00 : f32
    %2 = vector.broadcast %cst : f32 to vector<8x128xf32>
    %3 = arith.subf %2, %1 : vector<8x128xf32>
    %4 = math.exp %3 : vector<8x128xf32>
    %cst_1 = arith.constant 0.000000e+00 : f32
    %5 = vector.broadcast %cst_1 : f32 to vector<8x128xf32>
    %6 = arith.cmpf oge, %0, %5 : vector<8x128xf32>
    %cst_2 = arith.constant 2.000000e+00 : f32
    %7 = vector.broadcast %cst_2 : f32 to vector<8x128xf32>
    %8 = arith.mulf %7, %4 : vector<8x128xf32>
    %9 = arith.mulf %4, %4 : vector<8x128xf32>
    %cst_3 = arith.constant 1.000000e+00 : f32
    %10 = vector.broadcast %cst_3 : f32 to vector<8x128xf32>
    %11 = arith.addf %10, %8 : vector<8x128xf32>
    %12 = arith.addf %8, %9 : vector<8x128xf32>
    %13 = arith.select %6, %11, %12 : vector<8x128xi1>, vector<8x128xf32>
    %cst_4 = arith.constant 1.000000e+00 : f32
    %14 = vector.broadcast %cst_4 : f32 to vector<8x128xf32>
    %15 = arith.addf %14, %8 : vector<8x128xf32>
    %cst_5 = arith.constant 2.000000e+00 : f32
    %16 = vector.broadcast %cst_5 : f32 to vector<8x128xf32>
    %17 = arith.mulf %16, %9 : vector<8x128xf32>
    %18 = arith.addf %15, %17 : vector<8x128xf32>
    %cst_6 = arith.constant 2.000000e+00 : f32
    %19 = vector.broadcast %cst_6 : f32 to vector<8x128xf32>
    %20 = arith.addf %19, %8 : vector<8x128xf32>
    %21 = arith.addf %20, %9 : vector<8x128xf32>
    %22 = arith.select %6, %18, %21 : vector<8x128xi1>, vector<8x128xf32>
    %23 = tpu.reciprocal %22 : vector<8x128xf32> -> vector<8x128xf32>
    %24 = arith.mulf %13, %23 : vector<8x128xf32>
    %25 = arith.mulf %0, %24 : vector<8x128xf32>
    %c0_7 = arith.constant 0 : index
    %c0_8 = arith.constant 0 : index
    %26 = vector.load %arg2[%c0_7, %c0_8] : memref<8x128xf32, #tpu.memory_space<vmem>>, vector<8x128xf32>
    tpu.vector_store %arg2[%c0_7, %c0_8], %25 {strides = array<i32>} : memref<8x128xf32, #tpu.memory_space<vmem>>, vector<8x128xf32>,
    return
  }
  func.func @transform_0(%arg0: i32) -> (i32, i32) {
    %c0_i32 = arith.constant 0 : i32
    %c0_i32_0 = arith.constant 0 : i32
    return %arg0, %c0_i32 : i32, i32
  }
  func.func @transform_1(%arg0: i32) -> (i32, i32) {
    %c0_i32 = arith.constant 0 : i32
    %c0_i32_0 = arith.constant 0 : i32
    return %arg0, %c0_i32 : i32, i32
  }
}

</mosaic_0001>

<llo_original>
// kernel: tpu_custom_call.1
$region0: #{tpu_custom_call.1}
  #allocation0 [shape = 'u32[]', space=smem, size = 0x4, offset = 0x4, fixed_abs, tag = 'smem constant byte address 0x4 - core index']
  #allocation1 [shape = 'u32[72,128]{1,0:T(1,128)}', space=vmem, size = 0x9000, scoped, tag = 'internal scratch']
  %s0 = inlined_call_operand.hbm [shape: f32[16,128], index: 0, kind: input, shape index: {}]
  %s1 = inlined_call_operand.hbm [shape: f32[16,128], index: 1, kind: output, shape index: {}]
  %s2 = sld [smem:[#allocation0]]
  $region41: #{tpu_custom_call.1} parent=0
    _
  %s4 = ssub.s32 1, %s2
  %s5 = scalar_select 0, %s4, %s2
  $region1: #{tpu_custom_call.1} parent=0
    #allocation2 [shape = 'u8[8192]{0}', space=vmem, size = 0x2000, scoped, tag = 'input window, operand 0']
    #allocation3 [shape = 's32[2]{0}', space=sflag, size = 0x8, scoped, tag = 'scoped memory for tpu_custom_call.1']
    #allocation4 [shape = 's32[2]{0}', space=sflag, size = 0x8, scoped, tag = 'scoped memory for tpu_custom_call.1']
    #allocation5 [shape = 'u8[8192]{0}', space=vmem, size = 0x2000, scoped, tag = 'output window, operand 0']
    %6 = vsyncpa [#allocation3], 0
    %s7 = scalar_lea.sflag [#allocation3], 1
    %8 = vsyncpa %s7, 0
    %9 = vsyncpa [#allocation4], 0
    %s10 = scalar_lea.sflag [#allocation4], 1
    %11 = vsyncpa %s10, 0
    loop: start=0, step=1, limit=4
    $region2: #{tpu_custom_call.1} parent=1 // loop_pre_header
      _
    $region3: #{tpu_custom_call.1} parent=1 // loop_header
      %s13 = sphi 0, %s17
      %p14 = scmp.ge.s32.totalorder %s13, 4
      %s23 = sphi 0, %s25
      %s26 = sphi 0, %s23
      %s27 = sphi 0, %s26
      %s43 = sphi 0, %s27
      %s49 = sphi 0, %s51
      %s52 = sphi 0, %s49
      %s53 = sphi 0, %s52
      %s69 = sphi 0, %s53
    $region4: #{tpu_custom_call.1} parent=1 // loop_header_branch
      %16 = sbr.rel (%p14) target = $region8
    $region5: #{tpu_custom_call.1} parent=1 // loop_body
      %s18 = ssub.s32 %s13, 1
      %s19 = ssub.s32 %s13, 2
      %s20 = sadd.s32 %s13, 1
      %s21 = ssub.s32 %s13, %s20
      %p22 = scmp.eq.s32.totalorder %s21, 0
      %s24 = sadd.s32 %s23, 1
      %s25 = scalar_select %p22, %s23, %s24
      %p28 = pneg %p22
      %p29 = scmp.eq.s32.totalorder %s13, 1
      %p30 = por %p28, %p29
      %p31 = scmp.ne.s32.totalorder %s23, %s26
      %p32 = scmp.eq.s32.totalorder %s13, 0
      %p33 = por %p31, %p32
      %p34 = scmp.ne.s32.totalorder %s23, %s26
      %p35 = scmp.eq.s32.totalorder %s18, 1
      %p36 = por %p34, %p35
      %p37 = scmp.ne.s32.totalorder %s26, %s27
      %p38 = scmp.eq.s32.totalorder %s18, 0
      %p39 = por %p37, %p38
      %p40 = scmp.ne.s32.totalorder %s26, %s27
      %p41 = scmp.eq.s32.totalorder %s19, 1
      %p42 = por %p40, %p41
      %p44 = scmp.ne.s32.totalorder %s27, %s43
      %p45 = scmp.eq.s32.totalorder %s19, 0
      %p46 = por %p44, %p45
      %s47 = ssub.s32 %s13, %s20
      %p48 = scmp.eq.s32.totalorder %s47, 0
      %s50 = sadd.s32 %s49, 1
      %s51 = scalar_select %p48, %s49, %s50
      %p54 = pneg %p48
      %p55 = scmp.eq.s32.totalorder %s13, 1
      %p56 = por %p54, %p55
      %p57 = scmp.ne.s32.totalorder %s49, %s52
      %p58 = scmp.eq.s32.totalorder %s13, 0
      %p59 = por %p57, %p58
      %p60 = scmp.ne.s32.totalorder %s49, %s52
      %p61 = scmp.eq.s32.totalorder %s18, 1
      %p62 = por %p60, %p61
      %p63 = scmp.ne.s32.totalorder %s52, %s53
      %p64 = scmp.eq.s32.totalorder %s18, 0
      %p65 = por %p63, %p64
      %p66 = scmp.ne.s32.totalorder %s52, %s53
      %p67 = scmp.eq.s32.totalorder %s19, 1
      %p68 = por %p66, %p67
      %p70 = scmp.ne.s32.totalorder %s53, %s69
      %p71 = scmp.eq.s32.totalorder %s19, 0
      %p72 = por %p70, %p71
      %p73 = scmp.le.s32.totalorder 1, %s13
      %p74 = scmp.lt.s32.totalorder %s13, 3
      %p75 = pnand %p73, %p74
      %p76 = pneg %p75
      // Predicated region
      $region9: #{tpu_custom_call.1} parent=5 // pred_check
        _
      $region10: #{tpu_custom_call.1} parent=5 // pred_check_branch
        %78 = sbr.rel (%p75) target = $region12
      $region11: #{tpu_custom_call.1} parent=5 // pred_region
        %s79 = ssub.s32 %s13, 1
      $region12: #{tpu_custom_call.1} parent=5 // pred_fallthru
        _
      %p80 = scmp.lt.s32.totalorder %s13, 2
      // Predicated region
      $region13: #{tpu_custom_call.1} parent=5 // pred_check
        %p81 = pneg %p80
      $region14: #{tpu_custom_call.1} parent=5 // pred_check_branch
        %83 = sbr.rel (%p81) target = $region16
      $region15: #{tpu_custom_call.1} parent=5 // pred_region
        // Predicated region
        $region17: #{tpu_custom_call.1} parent=15 // pred_check
          %p84 = pneg %p33
        $region18: #{tpu_custom_call.1} parent=15 // pred_check_branch
          %86 = sbr.rel (%p84) target = $region20
        $region19: #{tpu_custom_call.1} parent=15 // pred_region
          %s87 = sand.u32 %s23, 1
          %s88 = scalar_lea.sflag [#allocation3], %s87
          %s89 = sand.u32 %s23, 1
          %s90 = smul.addr %s89, 8
          %s91 = scalar_lea.vmem [#allocation2], %s90
          %93 = vsyncadd %s88, 0
          %s94 = smul.addr %s13, 8
          %s95 = scalar_lea.hbm %s0, %s94
          %s97 = sshll.u32 %s95, 4
          %s98 = int_to_ptr.hbm [resolvable:$true] %s97
          %s99 = sshll.u32 %s91, 4
          %s100 = int_to_ptr.vmem [resolvable:$true] %s99
          %102 = dma.hbm_to_vmem [thread:$0]  %s98, 128, %s100, %s88
        $region20: #{tpu_custom_call.1} parent=15 // pred_fallthru
          _
      $region16: #{tpu_custom_call.1} parent=5 // pred_fallthru
        _
      %p103 = scmp.le.s32.totalorder 1, %s13
      %p104 = scmp.lt.s32.totalorder %s13, 3
      %p105 = pnand %p103, %p104
      %p106 = pneg %p105
      // Predicated region
      $region21: #{tpu_custom_call.1} parent=5 // pred_check
        _
      $region22: #{tpu_custom_call.1} parent=5 // pred_check_branch
        %108 = sbr.rel (%p105) target = $region24
      $region23: #{tpu_custom_call.1} parent=5 // pred_region
        %s109 = ssub.s32 %s13, 1
        %s110 = sand.u32 %s26, 1
        %s111 = scalar_lea.sflag [#allocation3], %s110
        %s112 = sand.u32 %s26, 1
        %s113 = smul.addr %s112, 8
        %s114 = scalar_lea.vmem [#allocation2], %s113
        // Predicated region
        $region25: #{tpu_custom_call.1} parent=23 // pred_check
          %p115 = pneg %p39
        $region26: #{tpu_custom_call.1} parent=23 // pred_check_branch
          %117 = sbr.rel (%p115) target = $region28
        $region27: #{tpu_custom_call.1} parent=23 // pred_region
          %119 = dma.done %s111, 128
        $region28: #{tpu_custom_call.1} parent=23 // pred_fallthru
          _
        %s120 = sand.u32 %s26, 1
        %s121 = scalar_lea.sflag [#allocation3], %s120
        %s122 = sand.u32 %s26, 1
        %s123 = smul.addr %s122, 8
        %s124 = scalar_lea.vmem [#allocation2], %s123
        %p125 = pneg %p39
        %p126 = pneg %p36
        %p127 = pneg %p65
        %p128 = pneg %p62
        %s129 = sand.u32 %s52, 1
        %s130 = scalar_lea.sflag [#allocation4], %s129
        %s131 = sand.u32 %s52, 1
        %s132 = smul.addr %s131, 8
        %s133 = scalar_lea.vmem [#allocation5], %s132
        %v134 = vld [vmem:[%s114] sm:$0xff]
        %v135 = vand.u32 2147483647, %v134
        %v136 = vsub.f32 0.0, %v135
        %v137 = vmul.f32 %v136, 1.442695
        %v138 = vpow.pop %v137
        %vm139 = vcmp.ge.f32.partialorder %v134, 0.0
        %v140 = vmul.f32 %v138, 2.0
        %v141 = vmul.f32 %v138, %v138
        %v142 = vadd.f32 %v140, 1.0
        %v143 = vadd.f32 %v140, %v141
        %v144 = vsel %vm139, %v142, %v143
        %v145 = vmul.f32 %v141, 2.0
        %v146 = vadd.f32 %v142, %v145
        %v147 = vadd.f32 %v140, 2.0
        %v148 = vadd.f32 %v147, %v141
        %v149 = vsel %vm139, %v146, %v148
        %v150 = vrcp.pop %v149
        %v151 = vmul.f32 %v149, %v150
        %v152 = vsub.f32 1.0, %v151
        %v153 = vmul.f32 %v150, %v152
        %v154 = vadd.f32 %v150, %v153
        %vm155 = vweird.f32 %v149
        %vm156 = vweird.f32 %v150
        %vm157 = vmor %vm155, %vm156
        %v158 = vsel %vm157, %v150, %v154
        %v159 = vand.u32 2147483647, %v149
        %vm160 = vcmp.eq.f32.partialorder %v159, 8.507059e+37
        %v161 = vand.u32 %v149, 2147483648
        %v162 = vor.u32 1.1754944e-38, %v161
        %v163 = vsel %vm160, %v162, %v158
        %v164 = vmul.f32 %v144, %v163
        %v165 = vmul.f32 %v134, %v164
        %166 = vst [vmem:[%s133] sm:$0xff] %v165
        %s167 = sand.u32 %s52, 1
        %s168 = scalar_lea.sflag [#allocation4], %s167
        %s169 = sand.u32 %s52, 1
        %s170 = smul.addr %s169, 8
        %s171 = scalar_lea.vmem [#allocation5], %s170
        // Predicated region
        $region29: #{tpu_custom_call.1} parent=23 // pred_check
          %p172 = pneg %p62
        $region30: #{tpu_custom_call.1} parent=23 // pred_check_branch
          %174 = sbr.rel (%p172) target = $region32
        $region31: #{tpu_custom_call.1} parent=23 // pred_region
          %176 = vsyncadd %s168, 0
          %s177 = smul.addr %s18, 8
          %s178 = scalar_lea.hbm %s1, %s177
          %s180 = sshll.u32 %s171, 4
          %s181 = int_to_ptr.vmem [resolvable:$true] %s180
          %s182 = sshll.u32 %s178, 4
          %s183 = int_to_ptr.hbm [resolvable:$true] %s182
          %185 = dma.vmem_to_hbm [thread:$0]  %s181, 128, %s183, %s168
        $region32: #{tpu_custom_call.1} parent=23 // pred_fallthru
          _
      $region24: #{tpu_custom_call.1} parent=5 // pred_fallthru
        _
      %p186 = scmp.le.s32.totalorder 2, %s13
      // Predicated region
      $region33: #{tpu_custom_call.1} parent=5 // pred_check
        %p187 = pneg %p186
      $region34: #{tpu_custom_call.1} parent=5 // pred_check_branch
        %189 = sbr.rel (%p187) target = $region36
      $region35: #{tpu_custom_call.1} parent=5 // pred_region
        %s190 = ssub.s32 %s13, 2
        // Predicated region
        $region37: #{tpu_custom_call.1} parent=35 // pred_check
          %p191 = pneg %p68
        $region38: #{tpu_custom_call.1} parent=35 // pred_check_branch
          %193 = sbr.rel (%p191) target = $region40
        $region39: #{tpu_custom_call.1} parent=35 // pred_region
          %s194 = sand.u32 %s53, 1
          %s195 = scalar_lea.sflag [#allocation4], %s194
          %s196 = sand.u32 %s53, 1
          %s197 = smul.addr %s196, 8
          %s198 = scalar_lea.vmem [#allocation5], %s197
          %200 = dma.done %s195, 128
        $region40: #{tpu_custom_call.1} parent=35 // pred_fallthru
          _
      $region36: #{tpu_custom_call.1} parent=5 // pred_fallthru
        _
    $region6: #{tpu_custom_call.1} parent=1 // loop_footer
      %s17 = sadd.s32 1, %s13
    $region7: #{tpu_custom_call.1} parent=1 // loop_footer_branch
      %12 = sbr.rel target = $region3
    $region8: #{tpu_custom_call.1} parent=1 // loop_exit
      _
    %201 = vsyncpa [#allocation3], 1
    %s202 = scalar_lea.sflag [#allocation3], 1
    %203 = vsyncpa %s202, 1
    %204 = vsyncpa [#allocation4], 1
    %s205 = scalar_lea.sflag [#allocation4], 1
    %206 = vsyncpa %s205, 1

</llo_original>
